<compile_context>
chip_gen: v6e
topology: v6e:2x2x1
jax: 0.10.0
libtpu: 0.0.40
codegen_flags: <defaults>
</compile_context>

<pallas_src>
import functools

import jax
import jax.numpy as jnp
from jax import lax
from jax.experimental import pallas as pl
from jax.experimental.pallas import tpu as pltpu

_EPS = 1e-5
_LANE = 128


def _round_up(x, m):
    return (x + m - 1) // m * m


def _pick_tile(dp, cap=512):
    """Largest tile <= cap that divides dp and is a multiple of 128."""
    for cand in (512, 384, 256, 128):
        if cand <= cap and dp % cand == 0:
            return cand
    return _LANE  # dp is always a multiple of 128 by construction


def _bn_act(h, g_row, b_row, res, out_dtype):
    """Train-mode BatchNorm1d (per-feature stats over the batch) -> (+res) -> ReLU.

    h: f32 (B, tn); g_row/b_row: f32 (1, tn); res: f32 (B, tn) or None.
    """
    mean = jnp.mean(h, axis=0, keepdims=True)
    var = jnp.maximum(jnp.mean(h * h, axis=0, keepdims=True) - mean * mean, 0.0)
    scale = g_row * lax.rsqrt(var + _EPS)      # EUP rsqrt (free slot)
    shift = b_row - mean * scale
    hn = h * scale + shift                     # one fused scale/shift per element
    if res is not None:
        hn = hn + res
    return jnp.maximum(hn, 0.0).astype(out_dtype)


def _layer_kernel(lhs_ref, w_ref, g_ref, b_ref, *rest,
                  add_residual: bool, single_k: bool):
    """Fused layer: tiled matmul -> train-mode BN -> (+residual) -> ReLU.

    Grid = (n, k): n = output-feature tile ("parallel"), k = contraction tile
    ("arbitrary", innermost).  lhs_ref is the whole LHS resident in VMEM with
    layout (k_tiles, B, tk); w_ref is a streamed (tk, tn) weight tile.
    """
    if single_k:
        # Whole contraction in one MXU tile: no scratch accumulator, no pl.when.
        if add_residual:
            res_ref, o_ref = rest
        else:
            (o_ref,) = rest
        h = jnp.dot(lhs_ref[0], w_ref[...], preferred_element_type=jnp.float32)
        res = res_ref[...].astype(jnp.float32) if add_residual else None
        o_ref[...] = _bn_act(h, g_ref[...], b_ref[...], res,
                             o_ref.dtype).reshape(o_ref.shape)
        return

    if add_residual:
        res_ref, o_ref, acc_ref = rest          # layer 2: flat (B, tn) output tile
    else:
        o_ref, acc_ref = rest                   # layer 1: tiled (1, B, tn) output tile

    k = pl.program_id(1)

    @pl.when(k == 0)
    def _init():
        acc_ref[...] = jnp.zeros_like(acc_ref)

    # MXU: bf16 x bf16 -> f32 accumulation.
    acc_ref[...] += jnp.dot(lhs_ref[k], w_ref[...],
                            preferred_element_type=jnp.float32)

    @pl.when(k == pl.num_programs(1) - 1)
    def _epilogue():
        res = res_ref[...].astype(jnp.float32) if add_residual else None
        o_ref[...] = _bn_act(acc_ref[...], g_ref[...], b_ref[...], res,
                             o_ref.dtype).reshape(o_ref.shape)


def _fused_layer(lhs_tiled, w, gamma, beta, residual, *, out_dtype, tn, tk):
    """One Linear -> BN(train) [-> +residual] -> ReLU layer as a gridded pallas_call."""
    K, Bq, _ = lhs_tiled.shape
    Dp = w.shape[1]
    N = Dp // tn
    add_residual = residual is not None
    single_k = (K == 1)

    in_specs = [
        pl.BlockSpec((K, Bq, tk), lambda n, k: (0, 0, 0)),  # LHS: fetched once, resident
        pl.BlockSpec((tk, tn), lambda n, k: (k, n)),        # weight: streamed + pipelined
        pl.BlockSpec((1, tn), lambda n, k: (0, n)),         # gamma tile
        pl.BlockSpec((1, tn), lambda n, k: (0, n)),         # beta tile
    ]
    args = [lhs_tiled, w, gamma, beta]
    if add_residual:
        in_specs.append(pl.BlockSpec((Bq, tn), lambda n, k: (0, n)))
        args.append(residual)
        out_specs = pl.BlockSpec((Bq, tn), lambda n, k: (0, n))
        out_shape = jax.ShapeDtypeStruct((Bq, Dp), out_dtype)
    else:
        # Tiled layout (n_tiles, B, tn): feeds the next layer's LHS directly.
        out_specs = pl.BlockSpec((1, Bq, tn), lambda n, k: (n, 0, 0))
        out_shape = jax.ShapeDtypeStruct((N, Bq, tn), out_dtype)

    scratch_shapes = [] if single_k else [pltpu.VMEM((Bq, tn), jnp.float32)]

    itemsize = lambda dt: jnp.dtype(dt).itemsize
    block_bytes = (
        2 * lhs_tiled.size * itemsize(lhs_tiled.dtype)       # resident LHS (conservative x2)
        + 2 * tk * tn * itemsize(w.dtype)                    # weight tiles, double-buffered
        + 2 * 2 * tn * 4                                     # gamma/beta tiles
        + (2 * Bq * tn * 4 if add_residual else 0)           # residual tiles
        + 2 * Bq * tn * itemsize(out_dtype)                  # output tiles
        + (0 if single_k else Bq * tn * 4)                   # f32 accumulator scratch
    )
    vmem_limit = min(max(int(block_bytes * 1.5) + (2 << 20), 16 << 20), 64 << 20)

    bytes_accessed = int(
        w.size * itemsize(w.dtype)
        + lhs_tiled.size * itemsize(lhs_tiled.dtype)
        + Bq * Dp * itemsize(out_dtype)
        + 2 * Dp * 4
        + (Bq * Dp * 4 if add_residual else 0))

    return pl.pallas_call(
        functools.partial(_layer_kernel, add_residual=add_residual, single_k=single_k),
        out_shape=out_shape,
        grid=(N, K),
        in_specs=in_specs,
        out_specs=out_specs,
        scratch_shapes=scratch_shapes,
        compiler_params=pltpu.CompilerParams(
            dimension_semantics=("parallel", "arbitrary"),
            vmem_limit_bytes=vmem_limit),
        cost_estimate=pl.CostEstimate(
            flops=int(2 * Bq * Dp * Dp),
            transcendentals=int(Dp),
            bytes_accessed=bytes_accessed),
    )(*args)


def prepare_params(params, dim):
    """One-time glue (not per call): transpose Linear weights to (in, out), cast to
    bf16 for the MXU, pad the feature dim to a multiple of 128.  Linear biases are
    dropped: they are exactly cancelled by the train-mode BN mean subtraction."""
    dp = _round_up(dim, _LANE)

    def prep_w(w):  # PyTorch Linear weight is (out, in); kernel wants (in, out).
        wt = jnp.zeros((dp, dp), jnp.float32).at[:dim, :dim].set(
            w.T.astype(jnp.float32))
        return wt.astype(jnp.bfloat16)

    def prep_row(v, fill):
        return jnp.full((1, dp), fill, jnp.float32).at[0, :dim].set(
            v.astype(jnp.float32))

    return {
        "w1t": prep_w(params["w1"]),
        "w2t": prep_w(params["w2"]),
        "g1": prep_row(params["gamma1"], 1.0),
        "be1": prep_row(params["beta1"], 0.0),
        "g2": prep_row(params["gamma2"], 1.0),
        "be2": prep_row(params["beta2"], 0.0),
    }


def residual_block(x, prep, *, tile=None):
    """x: (B, dim) f32.  prep: dict from prepare_params().  Returns (B, dim) f32."""
    B, D = x.shape
    Dp = prep["w1t"].shape[0]
    tile = tile if tile is not None else _pick_tile(Dp)
    assert Dp % tile == 0 and tile % _LANE == 0
    K = Dp // tile

    xf = x.astype(jnp.float32)
    xp = xf if Dp == D else jnp.zeros((B, Dp), jnp.float32).at[:, :D].set(xf)
    # (B, Dp) -> (k_tiles, B, tile): contraction tiles on the leading axis.
    x_tiled = xp.astype(jnp.bfloat16).reshape(B, K, tile).transpose(1, 0, 2)

    # Layer 1: Linear -> BN -> ReLU  (hidden activation kept bf16 + tiled).
    a_tiled = _fused_layer(x_tiled, prep["w1t"], prep["g1"], prep["be1"], None,
                           out_dtype=jnp.bfloat16, tn=tile, tk=tile)
    # Layer 2: Linear -> BN -> +residual -> ReLU.
    out = _fused_layer(a_tiled, prep["w2t"], prep["g2"], prep["be2"], xp,
                       out_dtype=jnp.float32, tn=tile, tk=tile)
    return out if Dp == D else out[:, :D]


def init_params(dim, key):
    """Synthetic init matching nn.Linear / nn.BatchNorm1d shapes (BN affine randomized
    slightly so the gamma/beta path is actually exercised)."""
    k1, k2, k3, k4, k5, k6 = jax.random.split(key, 6)
    scale = 1.0 / jnp.sqrt(dim)
    return {
        "w1": jax.random.uniform(k1, (dim, dim), jnp.float32, -scale, scale),
        "b1": jax.random.uniform(k2, (dim,), jnp.float32, -scale, scale),
        "gamma1": 1.0 + 0.1 * jax.random.normal(k5, (dim,), jnp.float32),
        "beta1": 0.1 * jax.random.normal(k6, (dim,), jnp.float32),
        "w2": jax.random.uniform(k3, (dim, dim), jnp.float32, -scale, scale),
        "b2": jax.random.uniform(k4, (dim,), jnp.float32, -scale, scale),
        "gamma2": 1.0 + 0.1 * jax.random.normal(k2, (dim,), jnp.float32),
        "beta2": 0.1 * jax.random.normal(k1, (dim,), jnp.float32),
    }


def _reference(x, p, mxu_dtype=jnp.float32):
    """Pure-JAX replica of the PyTorch forward (train-mode BN, biases included).
    mxu_dtype=bfloat16 mirrors the kernel's MXU input precision."""
    def mm(a, w):
        return jnp.dot(a.astype(mxu_dtype), w.T.astype(mxu_dtype),
                       preferred_element_type=jnp.float32)

    h = mm(x, p["w1"]) + p["b1"]
    m = h.mean(0)
    v = ((h - m) ** 2).mean(0)
    h = (h - m) / jnp.sqrt(v + _EPS) * p["gamma1"] + p["beta1"]
    a = jnp.maximum(h, 0.0)
    if mxu_dtype == jnp.bfloat16:
        a = a.astype(jnp.bfloat16).astype(jnp.float32)  # hidden activation carried in bf16
    h = mm(a, p["w2"]) + p["b2"]
    m = h.mean(0)
    v = ((h - m) ** 2).mean(0)
    h = (h - m) / jnp.sqrt(v + _EPS) * p["gamma2"] + p["beta2"]
    return jnp.maximum(h + x, 0.0)


if __name__ == "__main__":
    B, dim = 64, 192          # pads to 256 features; tile=128 -> a real 2x2 grid per layer
    key = jax.random.PRNGKey(0)
    kx, kp = jax.random.split(key)
    x = jax.random.normal(kx, (B, dim), jnp.float32)
    params = init_params(dim, kp)
    prep = prepare_params(params, dim)

    # Multi-tile (streamed-weight, accumulator) path and auto-tile (single-k) path.
    out = jax.block_until_ready(residual_block(x, prep, tile=128))
    out_big = jax.block_until_ready(residual_block(x, prep))

    assert out.shape == (B, dim)

    ref_bf16 = _reference(x, params, mxu_dtype=jnp.bfloat16)
    ref_f32 = _reference(x, params, mxu_dtype=jnp.float32)

    # Tight check vs a reference that mirrors the bf16 MXU precision.
    assert jnp.allclose(out, ref_bf16, atol=1.5e-2, rtol=1.5e-2), "mismatch vs bf16 reference"
    # Semantic check vs the exact f32 PyTorch-equivalent forward (bf16 MXU noise only).
    assert jnp.allclose(out, ref_f32, atol=6e-2, rtol=6e-2), "mismatch vs f32 reference"
    # Tiling must not change the result (BN stats over the whole batch, per feature).
    assert jnp.allclose(out, out_big, atol=1e-2, rtol=1e-2), "tile-size dependence"

    print("KERNEL_OK")
</pallas_src>

<mosaic_0001>
module attributes {stable_mosaic.version = 11 : i64} {
  func.func @_layer_kernel(%arg0: i32, %arg1: i32, %arg2: memref<2x64x128xbf16, #tpu.memory_space<vmem>>, %arg3: memref<128x128xbf16, #tpu.memory_space<vmem>>, %arg4: memref<1x128xf32, #tpu.memory_space<vmem>>, %arg5: memref<1x128xf32, #tpu.memory_space<vmem>>, %arg6: memref<1x64x128xbf16, #tpu.memory_space<vmem>>, %arg7: memref<64x128xf32, #tpu.memory_space<vmem>>) attributes {dimension_semantics = [#tpu.dimension_semantics<parallel>, #tpu.dimension_semantics<arbitrary>], iteration_bounds = array<i64: 2, 2>, scalar_prefetch = 0 : i64, scratch_operands = 1 : i64, tpu.core_type = #tpu.core_type<tc>, window_params = [{pipeline_mode = #tpu.pipeline_mode<synchronous>, transform_indices = @transform_0, window_bounds = array<i64: 2, 64, 128>}, {transform_indices = @transform_1, window_bounds = array<i64: 128, 128>}, {transform_indices = @transform_2, window_bounds = array<i64: 1, 128>}, {transform_indices = @transform_3, window_bounds = array<i64: 1, 128>}, {transform_indices = @transform_4, window_bounds = array<i64: 1, 64, 128>}]} {
    %c0_i32 = arith.constant 0 : i32
    %0 = arith.cmpi eq, %arg1, %c0_i32 : i32
    %1 = arith.extui %0 : i1 to i32
    %c0_i32_0 = arith.constant 0 : i32
    %2 = arith.cmpi ne, %1, %c0_i32_0 : i32
    scf.if %2 {
      %cst_9 = arith.constant 0.000000e+00 : f32
      %14 = vector.broadcast %cst_9 : f32 to vector<64x128xf32>
      %c0_10 = arith.constant 0 : index
      %c0_11 = arith.constant 0 : index
      %15 = vector.load %arg7[%c0_10, %c0_11] : memref<64x128xf32, #tpu.memory_space<vmem>>, vector<64x128xf32>
      tpu.vector_store %arg7[%c0_10, %c0_11], %14 {strides = array<i32>} : memref<64x128xf32, #tpu.memory_space<vmem>>, vector<64x128xf32>,
    } else {
    }
    %c0 = arith.constant 0 : index
    %c0_1 = arith.constant 0 : index
    %3 = vector.load %arg7[%c0, %c0_1] : memref<64x128xf32, #tpu.memory_space<vmem>>, vector<64x128xf32>
    %4 = arith.index_cast %arg1 : i32 to index
    %c0_2 = arith.constant 0 : index
    %c0_3 = arith.constant 0 : index
    %5 = vector.load %arg2[%4, %c0_2, %c0_3] : memref<2x64x128xbf16, #tpu.memory_space<vmem>>, vector<1x64x128xbf16>
    %6 = vector.shape_cast %5 : vector<1x64x128xbf16> to vector<64x128xbf16>
    %c0_4 = arith.constant 0 : index
    %c0_5 = arith.constant 0 : index
    %7 = vector.load %arg3[%c0_4, %c0_5] : memref<128x128xbf16, #tpu.memory_space<vmem>>, vector<128x128xbf16>
    %cst = arith.constant dense<0.000000e+00> : vector<64x128xf32>
    %8 = tpu.matmul %6, %7, %cst {dimension_numbers = #tpu.dot_dimension_numbers<[1], [0], [0], [1], [0, 0, 1, 1], [], []>} : vector<64x128xbf16>, vector<128x128xbf16>, vector<64x128xf32> -> vector<64x128xf32>
    %9 = arith.addf %3, %8 : vector<64x128xf32>
    %c0_6 = arith.constant 0 : index
    %c0_7 = arith.constant 0 : index
    %10 = vector.load %arg7[%c0_6, %c0_7] : memref<64x128xf32, #tpu.memory_space<vmem>>, vector<64x128xf32>
    tpu.vector_store %arg7[%c0_6, %c0_7], %9 {strides = array<i32>} : memref<64x128xf32, #tpu.memory_space<vmem>>, vector<64x128xf32>,
    %c1_i32 = arith.constant 1 : i32
    %11 = arith.cmpi eq, %arg1, %c1_i32 : i32
    %12 = arith.extui %11 : i1 to i32
    %c0_i32_8 = arith.constant 0 : i32
    %13 = arith.cmpi ne, %12, %c0_i32_8 : i32
    scf.if %13 {
      %c0_9 = arith.constant 0 : index
      %c0_10 = arith.constant 0 : index
      %14 = vector.load %arg7[%c0_9, %c0_10] : memref<64x128xf32, #tpu.memory_space<vmem>>, vector<64x128xf32>
      %c0_11 = arith.constant 0 : index
      %c0_12 = arith.constant 0 : index
      %15 = vector.load %arg4[%c0_11, %c0_12] : memref<1x128xf32, #tpu.memory_space<vmem>>, vector<1x128xf32>
      %c0_13 = arith.constant 0 : index
      %c0_14 = arith.constant 0 : index
      %16 = vector.load %arg5[%c0_13, %c0_14] : memref<1x128xf32, #tpu.memory_space<vmem>>, vector<1x128xf32>
      %cst_15 = arith.constant dense<0.000000e+00> : vector<128xf32>
      %17 = vector.multi_reduction <add>, %14, %cst_15 [0] : vector<64x128xf32> to vector<128xf32>
      %18 = vector.shape_cast %17 : vector<128xf32> to vector<1x128xf32>
      %cst_16 = arith.constant 6.400000e+01 : f32
      %19 = vector.broadcast %cst_16 : f32 to vector<1x128xf32>
      %20 = arith.divf %18, %19 : vector<1x128xf32>
      %21 = arith.mulf %14, %14 : vector<64x128xf32>
      %cst_17 = arith.constant dense<0.000000e+00> : vector<128xf32>
      %22 = vector.multi_reduction <add>, %21, %cst_17 [0] : vector<64x128xf32> to vector<128xf32>
      %23 = vector.shape_cast %22 : vector<128xf32> to vector<1x128xf32>
      %cst_18 = arith.constant 6.400000e+01 : f32
      %24 = vector.broadcast %cst_18 : f32 to vector<1x128xf32>
      %25 = arith.divf %23, %24 : vector<1x128xf32>
      %26 = arith.mulf %20, %20 : vector<1x128xf32>
      %27 = arith.subf %25, %26 : vector<1x128xf32>
      %cst_19 = arith.constant 0.000000e+00 : f32
      %28 = vector.broadcast %cst_19 : f32 to vector<1x128xf32>
      %29 = arith.maximumf %27, %28 : vector<1x128xf32>
      %cst_20 = arith.constant 9.99999974E-6 : f32
      %30 = vector.broadcast %cst_20 : f32 to vector<1x128xf32>
      %31 = arith.addf %29, %30 : vector<1x128xf32>
      %32 = math.rsqrt %31 : vector<1x128xf32>
      %33 = arith.mulf %15, %32 : vector<1x128xf32>
      %34 = arith.mulf %20, %33 : vector<1x128xf32>
      %35 = arith.subf %16, %34 : vector<1x128xf32>
      %36 = vector.broadcast %33 : vector<1x128xf32> to vector<64x128xf32>
      %37 = arith.mulf %14, %36 : vector<64x128xf32>
      %38 = vector.broadcast %35 : vector<1x128xf32> to vector<64x128xf32>
      %39 = arith.addf %37, %38 : vector<64x128xf32>
      %cst_21 = arith.constant 0.000000e+00 : f32
      %40 = vector.broadcast %cst_21 : f32 to vector<64x128xf32>
      %41 = arith.maximumf %39, %40 : vector<64x128xf32>
      %42 = arith.truncf %41 : vector<64x128xf32> to vector<64x128xbf16>
      %43 = vector.shape_cast %42 : vector<64x128xbf16> to vector<1x64x128xbf16>
      %c0_22 = arith.constant 0 : index
      %c0_23 = arith.constant 0 : index
      %c0_24 = arith.constant 0 : index
      %44 = vector.load %arg6[%c0_22, %c0_23, %c0_24] : memref<1x64x128xbf16, #tpu.memory_space<vmem>>, vector<1x64x128xbf16>
      tpu.vector_store %arg6[%c0_22, %c0_23, %c0_24], %43 {strides = array<i32>} : memref<1x64x128xbf16, #tpu.memory_space<vmem>>, vector<1x64x128xbf16>,
    } else {
    }
    return
  }
  func.func @transform_0(%arg0: i32, %arg1: i32) -> (i32, i32, i32) {
    %c0_i32 = arith.constant 0 : i32
    %c0_i32_0 = arith.constant 0 : i32
    %c0_i32_1 = arith.constant 0 : i32
    %c0_i32_2 = arith.constant 0 : i32
    return %c0_i32, %c0_i32_0, %c0_i32_1 : i32, i32, i32
  }
  func.func @transform_1(%arg0: i32, %arg1: i32) -> (i32, i32) {
    %c0_i32 = arith.constant 0 : i32
    return %arg1, %arg0 : i32, i32
  }
  func.func @transform_2(%arg0: i32, %arg1: i32) -> (i32, i32) {
    %c0_i32 = arith.constant 0 : i32
    %c0_i32_0 = arith.constant 0 : i32
    return %c0_i32, %arg0 : i32, i32
  }
  func.func @transform_3(%arg0: i32, %arg1: i32) -> (i32, i32) {
    %c0_i32 = arith.constant 0 : i32
    %c0_i32_0 = arith.constant 0 : i32
    return %c0_i32, %arg0 : i32, i32
  }
  func.func @transform_4(%arg0: i32, %arg1: i32) -> (i32, i32, i32) {
    %c0_i32 = arith.constant 0 : i32
    %c0_i32_0 = arith.constant 0 : i32
    %c0_i32_1 = arith.constant 0 : i32
    return %arg0, %c0_i32, %c0_i32_0 : i32, i32, i32
  }
}

</mosaic_0001>

<llo_original>
// kernel: tpu_custom_call.1
$region0: #{tpu_custom_call.1}
  #allocation0 [shape = 'u32[]', space=smem, size = 0x4, offset = 0x4, fixed_abs, tag = 'smem constant byte address 0x4 - core index']
  #allocation1 [shape = 'u32[144,128]{1,0:T(1,128)}', space=vmem, size = 0x12000, scoped, tag = 'internal scratch']
  #allocation2 [shape = 'f32[64,128]{1,0:T(8,128)}', space=vmem, size = 0x8000, scoped, tag = 'scratch operand']
  %s0 = inlined_call_operand.hbm [shape: bf16[2,64,128], index: 0, kind: input, shape index: {}]
  %s1 = inlined_call_operand.hbm [shape: bf16[256,256], index: 1, kind: input, shape index: {}]
  %s2 = inlined_call_operand.vmem [shape: f32[1,256], index: 2, kind: input, shape index: {}]
  %s3 = inlined_call_operand.vmem [shape: f32[1,256], index: 3, kind: input, shape index: {}]
  %s4 = inlined_call_operand.hbm [shape: bf16[2,64,128], index: 4, kind: output, shape index: {}]
  %s5 = sld [smem:[#allocation0]]
  $region65: #{tpu_custom_call.1} parent=0
    _
  %s7 = ssub.s32 1, %s5
  %s8 = scalar_select 0, %s7, %s5
  $region1: #{tpu_custom_call.1} parent=0
    #allocation3 [shape = 'u8[32768]{0}', space=vmem, size = 0x8000, scoped, tag = 'input window, operand 0, single buffered']
    #allocation4 [shape = 's32[2]{0}', space=sflag, size = 0x8, scoped, tag = 'scoped memory for tpu_custom_call.1']
    #allocation5 [shape = 's32[2]{0}', space=sflag, size = 0x8, scoped, tag = 'scoped memory for tpu_custom_call.1']
    #allocation6 [shape = 'u8[65536]{0}', space=vmem, size = 0x10000, scoped, tag = 'input window, operand 1']
    #allocation7 [shape = 's32[2]{0}', space=sflag, size = 0x8, scoped, tag = 'scoped memory for tpu_custom_call.1']
    #allocation8 [shape = 'u8[32768]{0}', space=vmem, size = 0x8000, scoped, tag = 'output window, operand 0']
    %9 = vsyncpa [#allocation4], 0
    %10 = vsyncpa [#allocation7], 0
    %s11 = scalar_lea.sflag [#allocation7], 1
    %12 = vsyncpa %s11, 0
    %13 = vsyncpa [#allocation5], 0
    %s14 = scalar_lea.sflag [#allocation5], 1
    %15 = vsyncpa %s14, 0
    loop: start=0, step=1, limit=6
    $region2: #{tpu_custom_call.1} parent=1 // loop_pre_header
      _
    $region3: #{tpu_custom_call.1} parent=1 // loop_header
      %s17 = sphi 0, %s21
      %p18 = scmp.ge.s32.totalorder %s17, 6
      %s24 = sphi 0, %s36
      %s25 = sphi 0, %s32
      %s26 = sphi 0, %s24
      %s27 = sphi 0, %s25
      %s28 = sphi 0, %s26
      %s29 = sphi 0, %s27
      %s37 = sphi 0, %s37
      %s39 = sphi 0, %s37
      %s40 = sphi 0, %s39
      %s54 = sphi 0, %s40
      %s62 = sphi 0, %s64
      %s65 = sphi 0, %s62
      %s66 = sphi 0, %s65
      %s82 = sphi 0, %s66
      %s88 = sphi 0, %s90
      %s91 = sphi 0, %s88
      %s92 = sphi 0, %s91
      %s108 = sphi 0, %s92
      %s114 = sphi 0, %s116
      %s117 = sphi 0, %s114
      %s118 = sphi 0, %s117
      %s134 = sphi 0, %s118
      %s140 = sphi 0, %s142
      %s143 = sphi 0, %s140
      %s144 = sphi 0, %s143
      %s160 = sphi 0, %s144
    $region4: #{tpu_custom_call.1} parent=1 // loop_header_branch
      %20 = sbr.rel (%p18) target = $region8
    $region5: #{tpu_custom_call.1} parent=1 // loop_body
      %s22 = ssub.s32 %s17, 1
      %s23 = ssub.s32 %s17, 2
      %s30 = sadd.s32 1, %s25
      %p31 = scmp.ge.s32.totalorder %s30, 2
      %s32 = scalar_select %p31, 0, %s30
      %s33 = sadd.s32 1, %s24
      %s34 = scalar_select %p31, %s33, %s24
      %p35 = scmp.ge.s32.totalorder %s34, 2
      %s36 = scalar_select %p35, 0, %s34
      %s38 = sadd.s32 %s37, 1
      %p41 = scmp.eq.s32.totalorder %s17, 3
      %p42 = scmp.ne.s32.totalorder %s37, %s39
      %p43 = scmp.eq.s32.totalorder %s17, 0
      %p44 = por %p42, %p43
      %p45 = scmp.ne.s32.totalorder %s37, %s39
      %p46 = scmp.eq.s32.totalorder %s22, 3
      %p47 = por %p45, %p46
      %p48 = scmp.ne.s32.totalorder %s39, %s40
      %p49 = scmp.eq.s32.totalorder %s22, 0
      %p50 = por %p48, %p49
      %p51 = scmp.ne.s32.totalorder %s39, %s40
      %p52 = scmp.eq.s32.totalorder %s23, 3
      %p53 = por %p51, %p52
      %p55 = scmp.ne.s32.totalorder %s40, %s54
      %p56 = scmp.eq.s32.totalorder %s23, 0
      %p57 = por %p55, %p56
      %s58 = ssub.s32 %s25, %s32
      %s59 = ssub.s32 %s24, %s36
      %s60 = sor.u32 %s58, %s59
      %p61 = scmp.eq.s32.totalorder %s60, 0
      %s63 = sadd.s32 %s62, 1
      %s64 = scalar_select %p61, %s62, %s63
      %p67 = pneg %p61
      %p68 = scmp.eq.s32.totalorder %s17, 3
      %p69 = por %p67, %p68
      %p70 = scmp.ne.s32.totalorder %s62, %s65
      %p71 = scmp.eq.s32.totalorder %s17, 0
      %p72 = por %p70, %p71
      %p73 = scmp.ne.s32.totalorder %s62, %s65
      %p74 = scmp.eq.s32.totalorder %s22, 3
      %p75 = por %p73, %p74
      %p76 = scmp.ne.s32.totalorder %s65, %s66
      %p77 = scmp.eq.s32.totalorder %s22, 0
      %p78 = por %p76, %p77
      %p79 = scmp.ne.s32.totalorder %s65, %s66
      %p80 = scmp.eq.s32.totalorder %s23, 3
      %p81 = por %p79, %p80
      %p83 = scmp.ne.s32.totalorder %s66, %s82
      %p84 = scmp.eq.s32.totalorder %s23, 0
      %p85 = por %p83, %p84
      %s86 = ssub.s32 %s24, %s36
      %p87 = scmp.eq.s32.totalorder %s86, 0
      %s89 = sadd.s32 %s88, 1
      %s90 = scalar_select %p87, %s88, %s89
      %p93 = pneg %p87
      %p94 = scmp.eq.s32.totalorder %s17, 3
      %p95 = por %p93, %p94
      %p96 = scmp.ne.s32.totalorder %s88, %s91
      %p97 = scmp.eq.s32.totalorder %s17, 0
      %p98 = por %p96, %p97
      %p99 = scmp.ne.s32.totalorder %s88, %s91
      %p100 = scmp.eq.s32.totalorder %s22, 3
      %p101 = por %p99, %p100
      %p102 = scmp.ne.s32.totalorder %s91, %s92
      %p103 = scmp.eq.s32.totalorder %s22, 0
      %p104 = por %p102, %p103
      %p105 = scmp.ne.s32.totalorder %s91, %s92
      %p106 = scmp.eq.s32.totalorder %s23, 3
      %p107 = por %p105, %p106
      %p109 = scmp.ne.s32.totalorder %s92, %s108
      %p110 = scmp.eq.s32.totalorder %s23, 0
      %p111 = por %p109, %p110
      %s112 = ssub.s32 %s24, %s36
      %p113 = scmp.eq.s32.totalorder %s112, 0
      %s115 = sadd.s32 %s114, 1
      %s116 = scalar_select %p113, %s114, %s115
      %p119 = pneg %p113
      %p120 = scmp.eq.s32.totalorder %s17, 3
      %p121 = por %p119, %p120
      %p122 = scmp.ne.s32.totalorder %s114, %s117
      %p123 = scmp.eq.s32.totalorder %s17, 0
      %p124 = por %p122, %p123
      %p125 = scmp.ne.s32.totalorder %s114, %s117
      %p126 = scmp.eq.s32.totalorder %s22, 3
      %p127 = por %p125, %p126
      %p128 = scmp.ne.s32.totalorder %s117, %s118
      %p129 = scmp.eq.s32.totalorder %s22, 0
      %p130 = por %p128, %p129
      %p131 = scmp.ne.s32.totalorder %s117, %s118
      %p132 = scmp.eq.s32.totalorder %s23, 3
      %p133 = por %p131, %p132
      %p135 = scmp.ne.s32.totalorder %s118, %s134
      %p136 = scmp.eq.s32.totalorder %s23, 0
      %p137 = por %p135, %p136
      %s138 = ssub.s32 %s24, %s36
      %p139 = scmp.eq.s32.totalorder %s138, 0
      %s141 = sadd.s32 %s140, 1
      %s142 = scalar_select %p139, %s140, %s141
      %p145 = pneg %p139
      %p146 = scmp.eq.s32.totalorder %s17, 3
      %p147 = por %p145, %p146
      %p148 = scmp.ne.s32.totalorder %s140, %s143
      %p149 = scmp.eq.s32.totalorder %s17, 0
      %p150 = por %p148, %p149
      %p151 = scmp.ne.s32.totalorder %s140, %s143
      %p152 = scmp.eq.s32.totalorder %s22, 3
      %p153 = por %p151, %p152
      %p154 = scmp.ne.s32.totalorder %s143, %s144
      %p155 = scmp.eq.s32.totalorder %s22, 0
      %p156 = por %p154, %p155
      %p157 = scmp.ne.s32.totalorder %s143, %s144
      %p158 = scmp.eq.s32.totalorder %s23, 3
      %p159 = por %p157, %p158
      %p161 = scmp.ne.s32.totalorder %s144, %s160
      %p162 = scmp.eq.s32.totalorder %s23, 0
      %p163 = por %p161, %p162
      %p164 = scmp.le.s32.totalorder 1, %s17
      %p165 = scmp.lt.s32.totalorder %s17, 5
      %p166 = pnand %p164, %p165
      %p167 = pneg %p166
      // Predicated region
      $region9: #{tpu_custom_call.1} parent=5 // pred_check
        _
      $region10: #{tpu_custom_call.1} parent=5 // pred_check_branch
        %169 = sbr.rel (%p166) target = $region12
      $region11: #{tpu_custom_call.1} parent=5 // pred_region
        %s170 = ssub.s32 %s17, 1
        // Predicated region
        $region13: #{tpu_custom_call.1} parent=11 // pred_check
          %p171 = pneg %p50
        $region14: #{tpu_custom_call.1} parent=11 // pred_check_branch
          %173 = sbr.rel (%p171) target = $region16
        $region15: #{tpu_custom_call.1} parent=11 // pred_region
          %s175 = ssub.s32 1024, 1024
          %176 = vsyncadd [#allocation4], %s175
          %s177 = sshll.u32 [#allocation3], 4
          %s178 = int_to_ptr.vmem [resolvable:$true] %s177
          %183 = dma.hbm_to_vmem [thread:$0]  %s0, 1024, %s178, [#allocation4], 64, 64, 4
        $region16: #{tpu_custom_call.1} parent=11 // pred_fallthru
          _
      $region12: #{tpu_custom_call.1} parent=5 // pred_fallthru
        _
      %p184 = scmp.lt.s32.totalorder %s17, 4
      // Predicated region
      $region17: #{tpu_custom_call.1} parent=5 // pred_check
        %p185 = pneg %p184
      $region18: #{tpu_custom_call.1} parent=5 // pred_check_branch
        %187 = sbr.rel (%p185) target = $region20
      $region19: #{tpu_custom_call.1} parent=5 // pred_region
        // Predicated region
        $region21: #{tpu_custom_call.1} parent=19 // pred_check
          %p188 = pneg %p72
        $region22: #{tpu_custom_call.1} parent=19 // pred_check_branch
          %190 = sbr.rel (%p188) target = $region24
        $region23: #{tpu_custom_call.1} parent=19 // pred_region
          %s191 = sand.u32 %s62, 1
          %s192 = scalar_lea.sflag [#allocation7], %s191
          %s193 = sand.u32 %s62, 1
          %s194 = smul.addr %s193, 64
          %s195 = scalar_lea.vmem [#allocation6], %s194
          %s196 = smul.u32 16, %s25
          %s198 = ssub.s32 1024, 1024
          %199 = vsyncadd %s192, %s198
          %s200 = smul.addr %s196, 2
          %s201 = sadd.s32 %s24, %s200
          %s202 = smul.addr %s201, 64
          %s203 = scalar_lea.hbm %s1, %s202
          %s204 = sshll.u32 %s195, 4
          %s205 = int_to_ptr.vmem [resolvable:$true] %s204
          %210 = dma.hbm_to_vmem [thread:$0]  %s203, 1024, %s205, %s192, 128, 64, 4
        $region24: #{tpu_custom_call.1} parent=19 // pred_fallthru
          _
        // Predicated region
        $region25: #{tpu_custom_call.1} parent=19 // pred_check
          %p211 = pneg %p98
        $region26: #{tpu_custom_call.1} parent=19 // pred_check_branch
          %213 = sbr.rel (%p211) target = $region28
        $region27: #{tpu_custom_call.1} parent=19 // pred_region
          %p214 = scmp.lt.s32.totalorder %s24, 1
          %s215 = scalar_select %p214, %s24, 1
          %s216 = scalar_lea.vmem %s2, %s215
        $region28: #{tpu_custom_call.1} parent=19 // pred_fallthru
          _
        // Predicated region
        $region29: #{tpu_custom_call.1} parent=19 // pred_check
          %p217 = pneg %p124
        $region30: #{tpu_custom_call.1} parent=19 // pred_check_branch
          %219 = sbr.rel (%p217) target = $region32
        $region31: #{tpu_custom_call.1} parent=19 // pred_region
          %p220 = scmp.lt.s32.totalorder %s24, 1
          %s221 = scalar_select %p220, %s24, 1
          %s222 = scalar_lea.vmem %s3, %s221
        $region32: #{tpu_custom_call.1} parent=19 // pred_fallthru
          _
      $region20: #{tpu_custom_call.1} parent=5 // pred_fallthru
        _
      %p223 = scmp.le.s32.totalorder 1, %s17
      %p224 = scmp.lt.s32.totalorder %s17, 5
      %p225 = pnand %p223, %p224
      %p226 = pneg %p225
      // Predicated region
      $region33: #{tpu_custom_call.1} parent=5 // pred_check
        _
      $region34: #{tpu_custom_call.1} parent=5 // pred_check_branch
        %228 = sbr.rel (%p225) target = $region36
      $region35: #{tpu_custom_call.1} parent=5 // pred_region
        %s229 = ssub.s32 %s17, 1
        // Predicated region
        $region37: #{tpu_custom_call.1} parent=35 // pred_check
          %p230 = pneg %p50
        $region38: #{tpu_custom_call.1} parent=35 // pred_check_branch
          %232 = sbr.rel (%p230) target = $region40
        $region39: #{tpu_custom_call.1} parent=35 // pred_region
          %233 = dma.done [#allocation4], 1024
        $region40: #{tpu_custom_call.1} parent=35 // pred_fallthru
          _
        %s234 = sand.u32 %s65, 1
        %s235 = scalar_lea.sflag [#allocation7], %s234
        %s236 = sand.u32 %s65, 1
        %s237 = smul.addr %s236, 64
        %s238 = scalar_lea.vmem [#allocation6], %s237
        // Predicated region
        $region41: #{tpu_custom_call.1} parent=35 // pred_check
          %p239 = pneg %p78
        $region42: #{tpu_custom_call.1} parent=35 // pred_check_branch
          %241 = sbr.rel (%p239) target = $region44
        $region43: #{tpu_custom_call.1} parent=35 // pred_region
          %242 = dma.done %s235, 1024
        $region44: #{tpu_custom_call.1} parent=35 // pred_fallthru
          _
        %p243 = pneg %p50
        %p244 = pneg %p47
        %s245 = sand.u32 %s65, 1
        %s246 = scalar_lea.sflag [#allocation7], %s245
        %s247 = sand.u32 %s65, 1
        %s248 = smul.addr %s247, 64
        %s249 = scalar_lea.vmem [#allocation6], %s248
        %p250 = pneg %p78
        %p251 = pneg %p75
        %p252 = scmp.lt.s32.totalorder %s26, 1
        %s253 = scalar_select %p252, %s26, 1
        %s254 = scalar_lea.vmem %s2, %s253
        %p255 = pneg %p104
        %p256 = pneg %p101
        %p257 = scmp.lt.s32.totalorder %s26, 1
        %s258 = scalar_select %p257, %s26, 1
        %s259 = scalar_lea.vmem %s3, %s258
        %p260 = pneg %p130
        %p261 = pneg %p127
        %p262 = pneg %p156
        %p263 = pneg %p153
        %s264 = sand.u32 %s143, 1
        %s265 = scalar_lea.sflag [#allocation5], %s264
        %s266 = sand.u32 %s143, 1
        %s267 = smul.addr %s266, 32
        %s268 = scalar_lea.vmem [#allocation8], %s267
        %s269 = smul.u32 16, %s27
        %p270 = scmp.lt.s32.totalorder %s26, 1
        %s271 = scalar_select %p270, %s26, 1
        %s272 = scalar_lea.vmem %s2, %s271
        %p273 = scmp.lt.s32.totalorder %s26, 1
        %s274 = scalar_select %p273, %s26, 1
        %s275 = scalar_lea.vmem %s3, %s274
        %p277 = scmp.eq.s32.totalorder %s27, 0
        // Predicated region
        $region45: #{tpu_custom_call.1} parent=35 // pred_check
          %p278 = pneg %p277
        $region46: #{tpu_custom_call.1} parent=35 // pred_check_branch
          %280 = sbr.rel (%p278) target = $region48
        $region47: #{tpu_custom_call.1} parent=35 // pred_region
          %281 = vst [vmem:[#allocation2] sm:$0xff] 0.0
          %282 = vst [vmem:[#allocation2 + $0x8] sm:$0xff] 0.0
          %283 = vst [vmem:[#allocation2 + $0x10] sm:$0xff] 0.0
          %284 = vst [vmem:[#allocation2 + $0x18] sm:$0xff] 0.0
          %285 = vst [vmem:[#allocation2 + $0x20] sm:$0xff] 0.0
          %286 = vst [vmem:[#allocation2 + $0x28] sm:$0xff] 0.0
          %287 = vst [vmem:[#allocation2 + $0x30] sm:$0xff] 0.0
          %288 = vst [vmem:[#allocation2 + $0x38] sm:$0xff] 0.0
        $region48: #{tpu_custom_call.1} parent=35 // pred_fallthru
          _
        %v289 = vld [vmem:[#allocation2] sm:$0xff]
        %v290 = vld [vmem:[#allocation2 + $0x8] sm:$0xff]
        %v291 = vld [vmem:[#allocation2 + $0x10] sm:$0xff]
        %v292 = vld [vmem:[#allocation2 + $0x18] sm:$0xff]
        %v293 = vld [vmem:[#allocation2 + $0x20] sm:$0xff]
        %v294 = vld [vmem:[#allocation2 + $0x28] sm:$0xff]
        %v295 = vld [vmem:[#allocation2 + $0x30] sm:$0xff]
        %v296 = vld [vmem:[#allocation2 + $0x38] sm:$0xff]
        %s297 = smul.u32 %s27, 8
        %s298 = smul.addr %s297, 4
        %s299 = scalar_lea.vmem [#allocation3], %s298
        %v300 = vld [vmem:[%s299] sm:$0xf]
        %v301 = vld [vmem:[%s299 + $0x4] sm:$0xf]
        %v302 = vld [vmem:[%s299 + $0x8] sm:$0xf]
        %v303 = vld [vmem:[%s299 + $0xc] sm:$0xf]
        %v304 = vld [vmem:[%s299 + $0x10] sm:$0xf]
        %v305 = vld [vmem:[%s299 + $0x14] sm:$0xf]
        %v306 = vld [vmem:[%s299 + $0x18] sm:$0xf]
        %v307 = vld [vmem:[%s299 + $0x1c] sm:$0xf]
        %v308 = vld [vmem:[%s238] sm:$0xf]
        %v309 = vld [vmem:[%s238 + $0x4] sm:$0xf]
        %v310 = vld [vmem:[%s238 + $0x8] sm:$0xf]
        %v311 = vld [vmem:[%s238 + $0xc] sm:$0xf]
        %v312 = vld [vmem:[%s238 + $0x10] sm:$0xf]
        %v313 = vld [vmem:[%s238 + $0x14] sm:$0xf]
        %v314 = vld [vmem:[%s238 + $0x18] sm:$0xf]
        %v315 = vld [vmem:[%s238 + $0x1c] sm:$0xf]
        %v316 = vld [vmem:[%s238 + $0x20] sm:$0xf]
        %v317 = vld [vmem:[%s238 + $0x24] sm:$0xf]
        %v318 = vld [vmem:[%s238 + $0x28] sm:$0xf]
        %v319 = vld [vmem:[%s238 + $0x2c] sm:$0xf]
        %v320 = vld [vmem:[%s238 + $0x30] sm:$0xf]
        %v321 = vld [vmem:[%s238 + $0x34] sm:$0xf]
        %v322 = vld [vmem:[%s238 + $0x38] sm:$0xf]
        %v323 = vld [vmem:[%s238 + $0x3c] sm:$0xf]
        %v332 = vunpack.c.l.b16 %v300
        %v333 = vunpack.c.l.b16 %v301
        %v334 = vunpack.c.l.b16 %v302
        %v335 = vunpack.c.l.b16 %v303
        %v336 = vunpack.c.l.b16 %v304
        %v337 = vunpack.c.l.b16 %v305
        %v338 = vunpack.c.l.b16 %v306
        %v339 = vunpack.c.l.b16 %v307
        %v340 = vpack.c.b16 %v333, %v332
        %v341 = vpack.c.b16 %v335, %v334
        %v342 = vpack.c.b16 %v337, %v336
        %v343 = vpack.c.b16 %v339, %v338
        %v364 = vunpack.c.l.b16 %v308
        %v365 = vunpack.c.l.b16 %v309
        %v366 = vunpack.c.l.b16 %v310
        %v367 = vunpack.c.l.b16 %v311
        %v368 = vunpack.c.l.b16 %v312
        %v369 = vunpack.c.l.b16 %v313
        %v370 = vunpack.c.l.b16 %v314
        %v371 = vunpack.c.l.b16 %v315
        %v372 = vunpack.c.l.b16 %v316
        %v373 = vunpack.c.l.b16 %v317
        %v374 = vunpack.c.l.b16 %v318
        %v375 = vunpack.c.l.b16 %v319
        %v376 = vunpack.c.l.b16 %v320
        %v377 = vunpack.c.l.b16 %v321
        %v378 = vunpack.c.l.b16 %v322
        %v379 = vunpack.c.l.b16 %v323
        %v380 = vpack.c.b16 %v365, %v364
        %v381 = vpack.c.b16 %v367, %v366
        %v382 = vpack.c.b16 %v369, %v368
        %v383 = vpack.c.b16 %v371, %v370
        %v384 = vpack.c.b16 %v373, %v372
        %v385 = vpack.c.b16 %v375, %v374
        %v386 = vpack.c.b16 %v377, %v376
        %v387 = vpack.c.b16 %v379, %v378
        %396 = vmatprep.subr.bf16.mxu0 0
        %397 = vmatpush1.bf16.msra.mxu0 %v387
        %398 = vmatprep.subr.bf16.mxu0 0
        %399 = vmatpush1.bf16.msra.mxu0 %v386
        %400 = vmatprep.subr.bf16.mxu0 0
        %401 = vmatpush1.bf16.msra.mxu0 %v385
        %402 = vmatprep.subr.bf16.mxu0 0
        %403 = vmatpush1.bf16.msra.mxu0 %v384
        %404 = vmatprep.subr.bf16.mxu0 0
        %405 = vmatpush1.bf16.msra.mxu0 %v383
        %406 = vmatprep.subr.bf16.mxu0 0
        %407 = vmatpush1.bf16.msra.mxu0 %v382
        %408 = vmatprep.subr.bf16.mxu0 0
        %409 = vmatpush1.bf16.msra.mxu0 %v381
        %410 = vmatprep.subr.bf16.mxu0 0
        %411 = vmatpush1.bf16.msra.mxu0 %v380
        %412 = vmatprep.subr.bf16.mxu0 0
        %413 = vmatpush2.bf16.msra.mxu0 0
        %414 = vmatprep.subr.bf16.mxu0 0
        %415 = vmatpush2.bf16.msra.mxu0 0
        %416 = vmatprep.subr.bf16.mxu0 0
        %417 = vmatpush2.bf16.msra.mxu0 0
        %418 = vmatprep.subr.bf16.mxu0 0
        %419 = vmatpush2.bf16.msra.mxu0 0
        %420 = vmatprep.subr.bf16.mxu0 0
        %421 = vmatpush2.bf16.msra.mxu0 0
        %422 = vmatprep.subr.bf16.mxu0 0
        %423 = vmatpush2.bf16.msra.mxu0 0
        %424 = vmatprep.subr.bf16.mxu0 0
        %425 = vmatpush2.bf16.msra.mxu0 0
        %426 = vmatprep.subr.bf16.mxu0 0
        %427 = vmatpush2.bf16.msra.mxu0 0
        %428 = vmatprep.mubr.bf16.mxu0 0
        %429 = vmatmul.mubr.bf16.gmra.mxu0 %v340
        %v430 = vpop.f32.mrf.mxu0
        %v431 = vadd.f32 0.0, %v430
        %v432 = vpop.f32.mrf.mxu0
        %v433 = vpop.f32.mrf.mxu0
        %v434 = vadd.f32 0.0, %v433
        %v435 = vpop.f32.mrf.mxu0
        %436 = vmatprep.mubr.bf16.mxu0 0
        %437 = vmatmul.mubr.bf16.gmra.mxu0 %v341
        %v438 = vpop.f32.mrf.mxu0
        %v439 = vadd.f32 0.0, %v438
        %v440 = vpop.f32.mrf.mxu0
        %v441 = vpop.f32.mrf.mxu0
        %v442 = vadd.f32 0.0, %v441
        %v443 = vpop.f32.mrf.mxu0
        %444 = vmatprep.mubr.bf16.mxu0 0
        %445 = vmatmul.mubr.bf16.gmra.mxu0 %v342
        %v446 = vpop.f32.mrf.mxu0
        %v447 = vadd.f32 0.0, %v446
        %v448 = vpop.f32.mrf.mxu0
        %v449 = vpop.f32.mrf.mxu0
        %v450 = vadd.f32 0.0, %v449
        %v451 = vpop.f32.mrf.mxu0
        %452 = vmatprep.mubr.bf16.mxu0 0
        %453 = vmatmul.mubr.bf16.gmra.mxu0 %v343
        %v454 = vpop.f32.mrf.mxu0
        %v455 = vadd.f32 0.0, %v454
        %v456 = vpop.f32.mrf.mxu0
        %v457 = vpop.f32.mrf.mxu0
        %v458 = vadd.f32 0.0, %v457
        %v459 = vpop.f32.mrf.mxu0
        %460 = vdwg.mxu0
        %v461 = vadd.f32 %v289, %v431
        %v462 = vadd.f32 %v290, %v434
        %v463 = vadd.f32 %v291, %v439
        %v464 = vadd.f32 %v292, %v442
        %v465 = vadd.f32 %v293, %v447
        %v466 = vadd.f32 %v294, %v450
        %v467 = vadd.f32 %v295, %v455
        %v468 = vadd.f32 %v296, %v458
        %469 = vst [vmem:[#allocation2] sm:$0xff] %v461
        %470 = vst [vmem:[#allocation2 + $0x8] sm:$0xff] %v462
        %471 = vst [vmem:[#allocation2 + $0x10] sm:$0xff] %v463
        %472 = vst [vmem:[#allocation2 + $0x18] sm:$0xff] %v464
        %473 = vst [vmem:[#allocation2 + $0x20] sm:$0xff] %v465
        %474 = vst [vmem:[#allocation2 + $0x28] sm:$0xff] %v466
        %475 = vst [vmem:[#allocation2 + $0x30] sm:$0xff] %v467
        %476 = vst [vmem:[#allocation2 + $0x38] sm:$0xff] %v468
        %p477 = scmp.eq.s32.totalorder %s27, 1
        // Predicated region
        $region49: #{tpu_custom_call.1} parent=35 // pred_check
          %p478 = pneg %p477
        $region50: #{tpu_custom_call.1} parent=35 // pred_check_branch
          %480 = sbr.rel (%p478) target = $region52
        $region51: #{tpu_custom_call.1} parent=35 // pred_region
          %v481 = vld [vmem:[#allocation2] sm:$0xff]
          %v482 = vld [vmem:[#allocation2 + $0x8] sm:$0xff]
          %v483 = vld [vmem:[#allocation2 + $0x10] sm:$0xff]
          %v484 = vld [vmem:[#allocation2 + $0x18] sm:$0xff]
          %v485 = vld [vmem:[#allocation2 + $0x20] sm:$0xff]
          %v486 = vld [vmem:[#allocation2 + $0x28] sm:$0xff]
          %v487 = vld [vmem:[#allocation2 + $0x30] sm:$0xff]
          %v488 = vld [vmem:[#allocation2 + $0x38] sm:$0xff]
          %v489 = vld [vmem:[%s272] sm:$0x1]
          %v490 = vld [vmem:[%s275] sm:$0x1]
          %v491 = vadd.f32 %v481, %v482
          %v492 = vadd.f32 %v491, %v483
          %v493 = vadd.f32 %v492, %v484
          %v494 = vadd.f32 %v493, %v485
          %v495 = vadd.f32 %v494, %v486
          %v496 = vadd.f32 %v495, %v487
          %v497 = vadd.f32 %v496, %v488
          %v498 = vrot.slane %v497, 4
          %v499 = vadd.f32 %v497, %v498
          %v500 = vrot.slane %v499, 2
          %v501 = vadd.f32 %v499, %v500
          %v502 = vrot.slane %v501, 1
          %v503 = vadd.f32 %v501, %v502
          %v504 = vrcp.pop 64.0
          %v505 = vmul.f32 %v503, %v504
          %v506 = vmul.f32 %v481, %v481
          %v507 = vmul.f32 %v482, %v482
          %v508 = vmul.f32 %v483, %v483
          %v509 = vmul.f32 %v484, %v484
          %v510 = vmul.f32 %v485, %v485
          %v511 = vmul.f32 %v486, %v486
          %v512 = vmul.f32 %v487, %v487
          %v513 = vmul.f32 %v488, %v488
          %v514 = vadd.f32 %v506, %v507
          %v515 = vadd.f32 %v514, %v508
          %v516 = vadd.f32 %v515, %v509
          %v517 = vadd.f32 %v516, %v510
          %v518 = vadd.f32 %v517, %v511
          %v519 = vadd.f32 %v518, %v512
          %v520 = vadd.f32 %v519, %v513
          %v521 = vrot.slane %v520, 4
          %v522 = vadd.f32 %v520, %v521
          %v523 = vrot.slane %v522, 2
          %v524 = vadd.f32 %v522, %v523
          %v525 = vrot.slane %v524, 1
          %v526 = vadd.f32 %v524, %v525
          %v527 = vmul.f32 %v526, %v504
          %v528 = vmul.f32 %v505, %v505
          %v529 = vsub.f32 %v527, %v528
          %v530 = vmax.f32 %v529, 0.0
          %v531 = vadd.f32 %v530, 1e-05
          %v532 = vrsqrt.pop %v531
          %v533 = vmul.f32 %v489, %v532
          %v534 = vmul.f32 %v505, %v533
          %v535 = vsub.f32 %v490, %v534
          %v537 = vlaneseq
          %v538 = vshrl.u32 %v537, 7
          %v539 = vsub.s32 0, %v538
          %v540 = vrot.slane %v533, %v539
          %v542 = vmul.f32 %v481, %v540
          %v543 = vmul.f32 %v482, %v540
          %v544 = vmul.f32 %v483, %v540
          %v545 = vmul.f32 %v484, %v540
          %v546 = vmul.f32 %v485, %v540
          %v547 = vmul.f32 %v486, %v540
          %v548 = vmul.f32 %v487, %v540
          %v549 = vmul.f32 %v488, %v540
          %v551 = vlaneseq
          %v552 = vshrl.u32 %v551, 7
          %v553 = vsub.s32 0, %v552
          %v554 = vrot.slane %v535, %v553
          %v556 = vadd.f32 %v542, %v554
          %v557 = vadd.f32 %v543, %v554
          %v558 = vadd.f32 %v544, %v554
          %v559 = vadd.f32 %v545, %v554
          %v560 = vadd.f32 %v546, %v554
          %v561 = vadd.f32 %v547, %v554
          %v562 = vadd.f32 %v548, %v554
          %v563 = vadd.f32 %v549, %v554
          %v564 = vmax.f32 %v556, 0.0
          %v565 = vmax.f32 %v557, 0.0
          %v566 = vmax.f32 %v558, 0.0
          %v567 = vmax.f32 %v559, 0.0
          %v568 = vmax.f32 %v560, 0.0
          %v569 = vmax.f32 %v561, 0.0
          %v570 = vmax.f32 %v562, 0.0
          %v571 = vmax.f32 %v563, 0.0
          %v572 = vpack.c.bf16 %v565, %v564
          %v573 = vpack.c.bf16 %v567, %v566
          %v574 = vpack.c.bf16 %v569, %v568
          %v575 = vpack.c.bf16 %v571, %v570
          %v580 = vunpack.c.l.b16 %v572
          %v581 = vunpack.c.h.b16 %v572
          %v582 = vunpack.c.l.b16 %v573
          %v583 = vunpack.c.h.b16 %v573
          %v584 = vunpack.c.l.b16 %v574
          %v585 = vunpack.c.h.b16 %v574
          %v586 = vunpack.c.l.b16 %v575
          %v587 = vunpack.c.h.b16 %v575
          %v588 = vpack.c.b16 %v580, %v580
          %v589 = vpack.c.b16 %v581, %v581
          %v590 = vpack.c.b16 %v582, %v582
          %v591 = vpack.c.b16 %v583, %v583
          %v592 = vpack.c.b16 %v584, %v584
          %v593 = vpack.c.b16 %v585, %v585
          %v594 = vpack.c.b16 %v586, %v586
          %v595 = vpack.c.b16 %v587, %v587
          %604 = vst [vmem:[%s268] sm:$0xf] %v588
          %605 = vst [vmem:[%s268 + $0x4] sm:$0xf] %v589
          %606 = vst [vmem:[%s268 + $0x8] sm:$0xf] %v590
          %607 = vst [vmem:[%s268 + $0xc] sm:$0xf] %v591
          %608 = vst [vmem:[%s268 + $0x10] sm:$0xf] %v592
          %609 = vst [vmem:[%s268 + $0x14] sm:$0xf] %v593
          %610 = vst [vmem:[%s268 + $0x18] sm:$0xf] %v594
          %611 = vst [vmem:[%s268 + $0x1c] sm:$0xf] %v595
        $region52: #{tpu_custom_call.1} parent=35 // pred_fallthru
          _
        %s612 = sand.u32 %s143, 1
        %s613 = scalar_lea.sflag [#allocation5], %s612
        %s614 = sand.u32 %s143, 1
        %s615 = smul.addr %s614, 32
        %s616 = scalar_lea.vmem [#allocation8], %s615
        // Predicated region
        $region53: #{tpu_custom_call.1} parent=35 // pred_check
          %p617 = pneg %p153
        $region54: #{tpu_custom_call.1} parent=35 // pred_check_branch
          %619 = sbr.rel (%p617) target = $region56
        $region55: #{tpu_custom_call.1} parent=35 // pred_region
          %s621 = ssub.s32 512, 512
          %622 = vsyncadd %s613, %s621
          %s623 = smul.addr %s26, 8
          %s624 = smul.addr %s623, 64
          %s625 = scalar_lea.hbm %s4, %s624
          %s626 = sshll.u32 %s616, 4
          %s627 = int_to_ptr.vmem [resolvable:$true] %s626
          %632 = dma.vmem_to_hbm [thread:$0]  %s627, 512, %s625, %s613, 64, 64, 4
        $region56: #{tpu_custom_call.1} parent=35 // pred_fallthru
          _
      $region36: #{tpu_custom_call.1} parent=5 // pred_fallthru
        _
      %p633 = scmp.le.s32.totalorder 2, %s17
      // Predicated region
      $region57: #{tpu_custom_call.1} parent=5 // pred_check
        %p634 = pneg %p633
      $region58: #{tpu_custom_call.1} parent=5 // pred_check_branch
        %636 = sbr.rel (%p634) target = $region60
      $region59: #{tpu_custom_call.1} parent=5 // pred_region
        %s637 = ssub.s32 %s17, 2
        // Predicated region
        $region61: #{tpu_custom_call.1} parent=59 // pred_check
          %p638 = pneg %p159
        $region62: #{tpu_custom_call.1} parent=59 // pred_check_branch
          %640 = sbr.rel (%p638) target = $region64
        $region63: #{tpu_custom_call.1} parent=59 // pred_region
          %s641 = sand.u32 %s144, 1
          %s642 = scalar_lea.sflag [#allocation5], %s641
          %s643 = sand.u32 %s144, 1
          %s644 = smul.addr %s643, 32
          %s645 = scalar_lea.vmem [#allocation8], %s644
          %646 = dma.done %s642, 512
        $region64: #{tpu_custom_call.1} parent=59 // pred_fallthru
          _
      $region60: #{tpu_custom_call.1} parent=5 // pred_fallthru
        _
    $region6: #{tpu_custom_call.1} parent=1 // loop_footer
      %s21 = sadd.s32 1, %s17
    $region7: #{tpu_custom_call.1} parent=1 // loop_footer_branch
      %16 = sbr.rel target = $region3
    $region8: #{tpu_custom_call.1} parent=1 // loop_exit
      _
    %647 = vsyncpa [#allocation4], 1
    %s648 = scalar_lea.sflag [#allocation4], 1
    %649 = vsyncpa %s648, 1
    %650 = vsyncpa [#allocation7], 1
    %s651 = scalar_lea.sflag [#allocation7], 1
    %652 = vsyncpa %s651, 1
    %653 = vsyncpa [#allocation5], 1
    %s654 = scalar_lea.sflag [#allocation5], 1
    %655 = vsyncpa %s654, 1

</llo_original>
